<compile_context>
chip_gen: v7x
topology: tpu7x:2x2x1
jax: 0.10.0
libtpu: 0.0.40
codegen_flags: <defaults>
</compile_context>

<pallas_src>
import jax
import jax.numpy as jnp
from jax.experimental import pallas as pl
from jax.experimental.pallas import tpu as pltpu


# --------------------------------------------------------------------------
# Kernel
# --------------------------------------------------------------------------
def _net_kernel(x_ref, w1_ref, b1_ref, w2_ref, b2_ref, out_ref):
    # Hidden layer: x @ W1 + b1, ReLU (f32 accumulation on the MXU).
    x = x_ref[...]                                             # [tb, F]
    h = jnp.dot(x, w1_ref[...], preferred_element_type=jnp.float32)
    h = jnp.maximum(h + b1_ref[...], 0.0)                      # [tb, Hp], VPU
    # Output layer: h @ W2 + b2 (f32 accumulation on the MXU).
    q = jnp.dot(h, w2_ref[...], preferred_element_type=jnp.float32)
    # Op is a multiple of 128 -> unmasked lane-dense vst.
    out_ref[...] = (q + b2_ref[...]).astype(out_ref.dtype)     # [tb, Op]


# --------------------------------------------------------------------------
# Wrapper
# --------------------------------------------------------------------------
def net_forward(x, w1, b1, w2, b2, n_output=None, *, batch_tile=256):
    """Forward pass of the DQN Net.

    x:  [B, F]
    w1: [F, Hp]   b1: [1, Hp]   w2: [Hp, Op]   b2: [1, Op]
    (packed once via `pack_params`: [in, out] layout, widths padded to 128
     lanes -> no per-call transpose / reshape / pad glue ops)
    n_output: true (unpadded) output width; padded lanes are sliced off.
    """
    B, F = x.shape
    Hp = w1.shape[1]
    Op = w2.shape[1]
    if n_output is None:
        n_output = Op

    if B <= batch_tile:
        # Single grid step; block shape == full array shape (satisfies the
        # (8,128) rule even for tiny B).
        tb, Bp, x_p = B, B, x
    else:
        # Tile the batch; pad to a multiple of the tile so every block is
        # sublane-aligned and every grid step is full.
        tb = batch_tile
        Bp = pl.cdiv(B, tb) * tb
        x_p = jnp.pad(x, ((0, Bp - B), (0, 0))) if Bp != B else x

    grid = (Bp // tb,)
    const = lambda shape: pl.BlockSpec(shape, lambda i: (0,) * len(shape))

    out = pl.pallas_call(
        _net_kernel,
        out_shape=jax.ShapeDtypeStruct((Bp, Op), x.dtype),
        grid=grid,
        in_specs=[
            pl.BlockSpec((tb, F), lambda i: (i, 0)),  # batch tile of x
            const((F, Hp)),                           # W1 resident in VMEM
            const((1, Hp)),                           # b1 resident
            const((Hp, Op)),                          # W2 resident
            const((1, Op)),                           # b2 resident
        ],
        out_specs=pl.BlockSpec((tb, Op), lambda i: (i, 0)),
        compiler_params=pltpu.CompilerParams(
            dimension_semantics=("parallel",),        # shard batch tiles (v7x: 2 TCs)
        ),
    )(x_p, w1, b1, w2, b2)

    if Bp != B or Op != n_output:
        out = out[:B, :n_output]
    return out


# --------------------------------------------------------------------------
# Parameter init / packing
# --------------------------------------------------------------------------
def _round_up(n, m):
    return ((n + m - 1) // m) * m


def init_params(key, n_feature, n_hidden, n_output, dtype=jnp.float32):
    """nn.Linear-style init (U[-1/sqrt(fan_in), 1/sqrt(fan_in)]) in the
    kernel's [in, out] / row-bias layout (unpadded, reference-friendly)."""
    k1, k2, k3, k4 = jax.random.split(key, 4)
    bound1 = 1.0 / jnp.sqrt(jnp.float32(n_feature))
    bound2 = 1.0 / jnp.sqrt(jnp.float32(n_hidden))
    w1 = jax.random.uniform(k1, (n_feature, n_hidden), dtype, -bound1, bound1)
    b1 = jax.random.uniform(k2, (1, n_hidden), dtype, -bound1, bound1)
    w2 = jax.random.uniform(k3, (n_hidden, n_output), dtype, -bound2, bound2)
    b2 = jax.random.uniform(k4, (1, n_output), dtype, -bound2, bound2)
    return w1, b1, w2, b2


def pack_params(w1, b1, w2, b2, lane=128):
    """One-time packing: zero-pad hidden/output widths to a multiple of 128
    lanes so the kernel's intermediate and output slabs are lane-dense.
    Zero columns/rows contribute exactly 0 (relu(0)=0, 0-rows of W2, 0-bias),
    so the math is unchanged."""
    F, H = w1.shape
    O = w2.shape[1]
    Hp = _round_up(max(H, lane), lane)
    Op = _round_up(max(O, lane), lane)
    w1p = jnp.pad(w1, ((0, 0), (0, Hp - H)))
    b1p = jnp.pad(b1, ((0, 0), (0, Hp - H)))
    w2p = jnp.pad(w2, ((0, Hp - H), (0, Op - O)))
    b2p = jnp.pad(b2, ((0, 0), (0, Op - O)))
    return w1p, b1p, w2p, b2p


def _reference(x, w1, b1, w2, b2):
    # Same semantics as the PyTorch module (weights already [in, out]).
    return jnp.maximum(x @ w1 + b1, 0.0) @ w2 + b2


# --------------------------------------------------------------------------
# Self-test
# --------------------------------------------------------------------------
if __name__ == "__main__":
    key = jax.random.PRNGKey(0)
    batch, n_feature, n_hidden, n_output = 2, 4, 32, 8

    kx, kp, kbig = jax.random.split(key, 3)
    w1, b1, w2, b2 = init_params(kp, n_feature, n_hidden, n_output)
    w1p, b1p, w2p, b2p = pack_params(w1, b1, w2, b2)   # one-time, lane-dense

    # Small DQN-style single-state call (single grid point, full blocks).
    x = jax.random.normal(kx, (batch, n_feature), jnp.float32)
    out = jax.block_until_ready(
        net_forward(x, w1p, b1p, w2p, b2p, n_output))
    ref = _reference(x, w1, b1, w2, b2)
    assert out.shape == (batch, n_output)
    assert jnp.allclose(out, ref, atol=1e-5, rtol=1e-5)

    # Larger replay-minibatch style call exercising the batch grid + padding.
    xb = jax.random.normal(kbig, (300, n_feature), jnp.float32)
    outb = jax.block_until_ready(
        net_forward(xb, w1p, b1p, w2p, b2p, n_output))
    refb = _reference(xb, w1, b1, w2, b2)
    assert outb.shape == (300, n_output)
    assert jnp.allclose(outb, refb, atol=1e-5, rtol=1e-5)

    print("KERNEL_OK")
</pallas_src>

<mosaic_0001>
module attributes {stable_mosaic.version = 11 : i64} {
  func.func @_net_kernel(%arg0: i32, %arg1: memref<2x4xf32, #tpu.memory_space<vmem>>, %arg2: memref<4x128xf32, #tpu.memory_space<vmem>>, %arg3: memref<1x128xf32, #tpu.memory_space<vmem>>, %arg4: memref<128x128xf32, #tpu.memory_space<vmem>>, %arg5: memref<1x128xf32, #tpu.memory_space<vmem>>, %arg6: memref<2x128xf32, #tpu.memory_space<vmem>>) attributes {dimension_semantics = [#tpu.dimension_semantics<parallel>], iteration_bounds = array<i64: 1>, scalar_prefetch = 0 : i64, scratch_operands = 0 : i64, tpu.core_type = #tpu.core_type<tc>, window_params = [{transform_indices = @transform_0, window_bounds = array<i64: 2, 4>}, {pipeline_mode = #tpu.pipeline_mode<synchronous>, transform_indices = @transform_1, window_bounds = array<i64: 4, 128>}, {pipeline_mode = #tpu.pipeline_mode<synchronous>, transform_indices = @transform_2, window_bounds = array<i64: 1, 128>}, {pipeline_mode = #tpu.pipeline_mode<synchronous>, transform_indices = @transform_3, window_bounds = array<i64: 128, 128>}, {pipeline_mode = #tpu.pipeline_mode<synchronous>, transform_indices = @transform_4, window_bounds = array<i64: 1, 128>}, {transform_indices = @transform_5, window_bounds = array<i64: 2, 128>}]} {
    %c0 = arith.constant 0 : index
    %c0_0 = arith.constant 0 : index
    %0 = vector.load %arg1[%c0, %c0_0] : memref<2x4xf32, #tpu.memory_space<vmem>>, vector<2x4xf32>
    %c0_1 = arith.constant 0 : index
    %c0_2 = arith.constant 0 : index
    %1 = vector.load %arg2[%c0_1, %c0_2] : memref<4x128xf32, #tpu.memory_space<vmem>>, vector<4x128xf32>
    %cst = arith.constant dense<0.000000e+00> : vector<2x128xf32>
    %2 = tpu.matmul %0, %1, %cst {dimension_numbers = #tpu.dot_dimension_numbers<[1], [0], [0], [1], [0, 0, 1, 1], [], []>} : vector<2x4xf32>, vector<4x128xf32>, vector<2x128xf32> -> vector<2x128xf32>
    %c0_3 = arith.constant 0 : index
    %c0_4 = arith.constant 0 : index
    %3 = vector.load %arg3[%c0_3, %c0_4] : memref<1x128xf32, #tpu.memory_space<vmem>>, vector<1x128xf32>
    %4 = vector.broadcast %3 : vector<1x128xf32> to vector<2x128xf32>
    %5 = arith.addf %2, %4 : vector<2x128xf32>
    %cst_5 = arith.constant 0.000000e+00 : f32
    %6 = vector.broadcast %cst_5 : f32 to vector<2x128xf32>
    %7 = arith.maximumf %5, %6 : vector<2x128xf32>
    %c0_6 = arith.constant 0 : index
    %c0_7 = arith.constant 0 : index
    %8 = vector.load %arg4[%c0_6, %c0_7] : memref<128x128xf32, #tpu.memory_space<vmem>>, vector<128x128xf32>
    %cst_8 = arith.constant dense<0.000000e+00> : vector<2x128xf32>
    %9 = tpu.matmul %7, %8, %cst_8 {dimension_numbers = #tpu.dot_dimension_numbers<[1], [0], [0], [1], [0, 0, 1, 1], [], []>} : vector<2x128xf32>, vector<128x128xf32>, vector<2x128xf32> -> vector<2x128xf32>
    %c0_9 = arith.constant 0 : index
    %c0_10 = arith.constant 0 : index
    %10 = vector.load %arg5[%c0_9, %c0_10] : memref<1x128xf32, #tpu.memory_space<vmem>>, vector<1x128xf32>
    %11 = vector.broadcast %10 : vector<1x128xf32> to vector<2x128xf32>
    %12 = arith.addf %9, %11 : vector<2x128xf32>
    %c0_11 = arith.constant 0 : index
    %c0_12 = arith.constant 0 : index
    %13 = vector.load %arg6[%c0_11, %c0_12] : memref<2x128xf32, #tpu.memory_space<vmem>>, vector<2x128xf32>
    tpu.vector_store %arg6[%c0_11, %c0_12], %12 {strides = array<i32>} : memref<2x128xf32, #tpu.memory_space<vmem>>, vector<2x128xf32>,
    return
  }
  func.func @transform_0(%arg0: i32) -> (i32, i32) {
    %c0_i32 = arith.constant 0 : i32
    %c0_i32_0 = arith.constant 0 : i32
    return %arg0, %c0_i32 : i32, i32
  }
  func.func @transform_1(%arg0: i32) -> (i32, i32) {
    %c0_i32 = arith.constant 0 : i32
    %c0_i32_0 = arith.constant 0 : i32
    %c0_i32_1 = arith.constant 0 : i32
    return %c0_i32, %c0_i32_0 : i32, i32
  }
  func.func @transform_2(%arg0: i32) -> (i32, i32) {
    %c0_i32 = arith.constant 0 : i32
    %c0_i32_0 = arith.constant 0 : i32
    %c0_i32_1 = arith.constant 0 : i32
    return %c0_i32, %c0_i32_0 : i32, i32
  }
  func.func @transform_3(%arg0: i32) -> (i32, i32) {
    %c0_i32 = arith.constant 0 : i32
    %c0_i32_0 = arith.constant 0 : i32
    %c0_i32_1 = arith.constant 0 : i32
    return %c0_i32, %c0_i32_0 : i32, i32
  }
  func.func @transform_4(%arg0: i32) -> (i32, i32) {
    %c0_i32 = arith.constant 0 : i32
    %c0_i32_0 = arith.constant 0 : i32
    %c0_i32_1 = arith.constant 0 : i32
    return %c0_i32, %c0_i32_0 : i32, i32
  }
  func.func @transform_5(%arg0: i32) -> (i32, i32) {
    %c0_i32 = arith.constant 0 : i32
    %c0_i32_0 = arith.constant 0 : i32
    return %arg0, %c0_i32 : i32, i32
  }
}

</mosaic_0001>

<llo_original>
// kernel: tpu_custom_call.1
$region0: #{tpu_custom_call.1}
  #allocation0 [shape = 'u32[]', space=smem, size = 0x4, offset = 0x4, fixed_abs, tag = 'smem constant byte address 0x4 - core index']
  #allocation1 [shape = 'u32[144,128]{1,0:T(1,128)}', space=vmem, size = 0x12000, scoped, tag = 'internal scratch']
  %s0 = inlined_call_operand.hbm [shape: f32[2,4], index: 0, kind: input, shape index: {}]
  %s1 = inlined_call_operand.hbm [shape: f32[4,128], index: 1, kind: input, shape index: {}]
  %s2 = inlined_call_operand.vmem [shape: f32[1,128], index: 2, kind: input, shape index: {}]
  %s3 = inlined_call_operand.hbm [shape: f32[128,128], index: 3, kind: input, shape index: {}]
  %s4 = inlined_call_operand.vmem [shape: f32[1,128], index: 4, kind: input, shape index: {}]
  %s5 = inlined_call_operand.hbm [shape: f32[2,128], index: 5, kind: output, shape index: {}]
  %s6 = sld [smem:[#allocation0]]
  $region42: #{tpu_custom_call.1} parent=0
    _
  %s8 = ssub.s32 1, %s6
  %s9 = scalar_select 0, %s8, %s6
  $region1: #{tpu_custom_call.1} parent=0
    #allocation2 [shape = 'u8[1024]{0}', space=vmem, size = 0x400, scoped, tag = 'input window, operand 0, single buffered']
    #allocation3 [shape = 's32[1]{0}', space=sflag, size = 0x4, scoped, tag = 'scoped memory for tpu_custom_call.1']
    #allocation4 [shape = 's32[1]{0}', space=sflag, size = 0x4, scoped, tag = 'scoped memory for tpu_custom_call.1']
    #allocation5 [shape = 'u8[2048]{0}', space=vmem, size = 0x800, scoped, tag = 'input window, operand 1, single buffered']
    #allocation6 [shape = 's32[1]{0}', space=sflag, size = 0x4, scoped, tag = 'scoped memory for tpu_custom_call.1']
    #allocation7 [shape = 'u8[65536]{0}', space=vmem, size = 0x10000, scoped, tag = 'input window, operand 3, single buffered']
    #allocation8 [shape = 'u8[1024]{0}', space=vmem, size = 0x400, scoped, tag = 'output window, operand 0, single buffered']
    %10 = vsyncpa [#allocation3], 0
    %11 = vsyncpa [#allocation6], 0
    %12 = vsyncpa [#allocation4], 0
    // Predicated region
    $region2: #{tpu_custom_call.1} parent=1 // pred_check
      _
    $region3: #{tpu_custom_call.1} parent=1 // pred_check_branch
      %14 = sbr.rel (0) target = $region5
    $region4: #{tpu_custom_call.1} parent=1 // pred_region
      %s16 = ssub.s32 32, 32
      %17 = vsyncadd [#allocation3], %s16
      %s19 = sshll.u32 [#allocation2], 4
      %s20 = int_to_ptr.vmem [resolvable:$true] %s19
      %22 = dma.hbm_to_vmem [thread:$0]  %s0, 32, %s20, [#allocation3]
    $region5: #{tpu_custom_call.1} parent=1 // pred_fallthru
      _
    // Predicated region
    $region6: #{tpu_custom_call.1} parent=1 // pred_check
      _
    $region7: #{tpu_custom_call.1} parent=1 // pred_check_branch
      %24 = sbr.rel (0) target = $region9
    $region8: #{tpu_custom_call.1} parent=1 // pred_region
      %s26 = ssub.s32 64, 64
      %27 = vsyncadd [#allocation6], %s26
      %s29 = sshll.u32 [#allocation5], 4
      %s30 = int_to_ptr.vmem [resolvable:$true] %s29
      %32 = dma.hbm_to_vmem [thread:$0]  %s1, 64, %s30, [#allocation6]
    $region9: #{tpu_custom_call.1} parent=1 // pred_fallthru
      _
    // Predicated region
    $region10: #{tpu_custom_call.1} parent=1 // pred_check
      _
    $region11: #{tpu_custom_call.1} parent=1 // pred_check_branch
      %34 = sbr.rel (0) target = $region13
    $region12: #{tpu_custom_call.1} parent=1 // pred_region
      _
    $region13: #{tpu_custom_call.1} parent=1 // pred_fallthru
      _
    // Predicated region
    $region14: #{tpu_custom_call.1} parent=1 // pred_check
      _
    $region15: #{tpu_custom_call.1} parent=1 // pred_check_branch
      %36 = sbr.rel (0) target = $region17
    $region16: #{tpu_custom_call.1} parent=1 // pred_region
      %s38 = ssub.s32 2048, 2048
      %39 = vsyncadd [#allocation6], %s38
      %s40 = sshll.u32 [#allocation7], 4
      %s41 = int_to_ptr.vmem [resolvable:$true] %s40
      %46 = dma.hbm_to_vmem [thread:$0]  %s3, 2048, %s41, [#allocation6], 128, 128, 8
    $region17: #{tpu_custom_call.1} parent=1 // pred_fallthru
      _
    // Predicated region
    $region18: #{tpu_custom_call.1} parent=1 // pred_check
      _
    $region19: #{tpu_custom_call.1} parent=1 // pred_check_branch
      %48 = sbr.rel (0) target = $region21
    $region20: #{tpu_custom_call.1} parent=1 // pred_region
      _
    $region21: #{tpu_custom_call.1} parent=1 // pred_fallthru
      _
    // Predicated region
    $region22: #{tpu_custom_call.1} parent=1 // pred_check
      _
    $region23: #{tpu_custom_call.1} parent=1 // pred_check_branch
      %50 = sbr.rel (0) target = $region25
    $region24: #{tpu_custom_call.1} parent=1 // pred_region
      %51 = dma.done [#allocation3], 32
    $region25: #{tpu_custom_call.1} parent=1 // pred_fallthru
      _
    // Predicated region
    $region26: #{tpu_custom_call.1} parent=1 // pred_check
      _
    $region27: #{tpu_custom_call.1} parent=1 // pred_check_branch
      %53 = sbr.rel (0) target = $region29
    $region28: #{tpu_custom_call.1} parent=1 // pred_region
      %54 = dma.done [#allocation6], 64
    $region29: #{tpu_custom_call.1} parent=1 // pred_fallthru
      _
    // Predicated region
    $region30: #{tpu_custom_call.1} parent=1 // pred_check
      _
    $region31: #{tpu_custom_call.1} parent=1 // pred_check_branch
      %56 = sbr.rel (0) target = $region33
    $region32: #{tpu_custom_call.1} parent=1 // pred_region
      %57 = dma.done [#allocation6], 2048
    $region33: #{tpu_custom_call.1} parent=1 // pred_fallthru
      _
    %v58 = vld [vmem:[#allocation2] sm:$0x3]
    %v59 = vld [vmem:[#allocation5] sm:$0xf]
    %v60 = vld [vmem:[%s2] sm:$0x1]
    %v62 = vlaneseq
    %v63 = vshrl.u32 %v62, 7
    %v64 = vsub.s32 0, %v63
    %v65 = vrot.slane %v60, %v64
    %vm67 = vcmask 31744
    %v69 = vsel %vm67, %v58, 0
    %vm71 = vcmask 1043456
    %v73 = vsel %vm71, %v59, 0
    %75 = vmatprep.subr.mxu0 0.0
    %76 = vmatpush1.msra.mxu0 %v73
    %77 = vmatprep.subr.mxu0 0.0
    %78 = vmatpush1.msra.mxu0 0.0
    %79 = vmatprep.subr.mxu0 0.0
    %80 = vmatpush1.msra.mxu0 0.0
    %81 = vmatprep.subr.mxu0 0.0
    %82 = vmatpush1.msra.mxu0 0.0
    %83 = vmatprep.subr.mxu0 0.0
    %84 = vmatpush1.msra.mxu0 0.0
    %85 = vmatprep.subr.mxu0 0.0
    %86 = vmatpush1.msra.mxu0 0.0
    %87 = vmatprep.subr.mxu0 0.0
    %88 = vmatpush1.msra.mxu0 0.0
    %89 = vmatprep.subr.mxu0 0.0
    %90 = vmatpush1.msra.mxu0 0.0
    %91 = vmatprep.subr.mxu0 0.0
    %92 = vmatpush1.msra.mxu0 0.0
    %93 = vmatprep.subr.mxu0 0.0
    %94 = vmatpush1.msra.mxu0 0.0
    %95 = vmatprep.subr.mxu0 0.0
    %96 = vmatpush1.msra.mxu0 0.0
    %97 = vmatprep.subr.mxu0 0.0
    %98 = vmatpush1.msra.mxu0 0.0
    %99 = vmatprep.subr.mxu0 0.0
    %100 = vmatpush1.msra.mxu0 0.0
    %101 = vmatprep.subr.mxu0 0.0
    %102 = vmatpush1.msra.mxu0 0.0
    %103 = vmatprep.subr.mxu0 0.0
    %104 = vmatpush1.msra.mxu0 0.0
    %105 = vmatprep.subr.mxu0 0.0
    %106 = vmatpush1.msra.mxu0 0.0
    %107 = vmatprep.subr.mxu0 0.0
    %108 = vmatpush1.msra.mxu0 0.0
    %109 = vmatprep.subr.mxu0 0.0
    %110 = vmatpush1.msra.mxu0 0.0
    %111 = vmatprep.subr.mxu0 0.0
    %112 = vmatpush1.msra.mxu0 0.0
    %113 = vmatprep.subr.mxu0 0.0
    %114 = vmatpush1.msra.mxu0 0.0
    %115 = vmatprep.subr.mxu0 0.0
    %116 = vmatpush1.msra.mxu0 0.0
    %117 = vmatprep.subr.mxu0 0.0
    %118 = vmatpush1.msra.mxu0 0.0
    %119 = vmatprep.subr.mxu0 0.0
    %120 = vmatpush1.msra.mxu0 0.0
    %121 = vmatprep.subr.mxu0 0.0
    %122 = vmatpush1.msra.mxu0 0.0
    %123 = vmatprep.subr.mxu0 0.0
    %124 = vmatpush1.msra.mxu0 0.0
    %125 = vmatprep.subr.mxu0 0.0
    %126 = vmatpush1.msra.mxu0 0.0
    %127 = vmatprep.subr.mxu0 0.0
    %128 = vmatpush1.msra.mxu0 0.0
    %129 = vmatprep.subr.mxu0 0.0
    %130 = vmatpush1.msra.mxu0 0.0
    %131 = vmatprep.subr.mxu0 0.0
    %132 = vmatpush1.msra.mxu0 0.0
    %133 = vmatprep.subr.mxu0 0.0
    %134 = vmatpush1.msra.mxu0 0.0
    %135 = vmatprep.subr.mxu0 0.0
    %136 = vmatpush1.msra.mxu0 0.0
    %137 = vmatprep.subr.mxu0 0.0
    %138 = vmatpush1.msra.mxu0 0.0
    %139 = vmatprep.mubr.f32.mxu0 0.0
    %140 = vmatmul.mubr.f32.gmra.mrb[0].mxu0 %v69
    %v141 = vpop.f32.mrb[0].mxu0
    %v142 = vadd.f32 %v65, %v141
    %v143 = vpop.f32.mrb[0].mxu0
    %144 = vdwg.mxu0
    %v145 = vmax.f32 %v142, 0.0
    %v146 = vld [vmem:[#allocation7] sm:$0xff]
    %v147 = vld [vmem:[#allocation7 + $0x8] sm:$0xff]
    %v148 = vld [vmem:[#allocation7 + $0x10] sm:$0xff]
    %v149 = vld [vmem:[#allocation7 + $0x18] sm:$0xff]
    %v150 = vld [vmem:[#allocation7 + $0x20] sm:$0xff]
    %v151 = vld [vmem:[#allocation7 + $0x28] sm:$0xff]
    %v152 = vld [vmem:[#allocation7 + $0x30] sm:$0xff]
    %v153 = vld [vmem:[#allocation7 + $0x38] sm:$0xff]
    %v154 = vld [vmem:[#allocation7 + $0x40] sm:$0xff]
    %v155 = vld [vmem:[#allocation7 + $0x48] sm:$0xff]
    %v156 = vld [vmem:[#allocation7 + $0x50] sm:$0xff]
    %v157 = vld [vmem:[#allocation7 + $0x58] sm:$0xff]
    %v158 = vld [vmem:[#allocation7 + $0x60] sm:$0xff]
    %v159 = vld [vmem:[#allocation7 + $0x68] sm:$0xff]
    %v160 = vld [vmem:[#allocation7 + $0x70] sm:$0xff]
    %v161 = vld [vmem:[#allocation7 + $0x78] sm:$0xff]
    %v162 = vld [vmem:[%s4] sm:$0x1]
    %v164 = vlaneseq
    %v165 = vshrl.u32 %v164, 7
    %v166 = vsub.s32 0, %v165
    %v167 = vrot.slane %v162, %v166
    %169 = vmatprep.subr.mxu0 0.0
    %170 = vmatpush1.msra.mxu0 %v146
    %171 = vmatprep.subr.mxu0 0.0
    %172 = vmatpush1.msra.mxu0 %v147
    %173 = vmatprep.subr.mxu0 0.0
    %174 = vmatpush1.msra.mxu0 %v148
    %175 = vmatprep.subr.mxu0 0.0
    %176 = vmatpush1.msra.mxu0 %v149
    %177 = vmatprep.subr.mxu0 0.0
    %178 = vmatpush1.msra.mxu0 %v150
    %179 = vmatprep.subr.mxu0 0.0
    %180 = vmatpush1.msra.mxu0 %v151
    %181 = vmatprep.subr.mxu0 0.0
    %182 = vmatpush1.msra.mxu0 %v152
    %183 = vmatprep.subr.mxu0 0.0
    %184 = vmatpush1.msra.mxu0 %v153
    %185 = vmatprep.subr.mxu0 0.0
    %186 = vmatpush1.msra.mxu0 %v154
    %187 = vmatprep.subr.mxu0 0.0
    %188 = vmatpush1.msra.mxu0 %v155
    %189 = vmatprep.subr.mxu0 0.0
    %190 = vmatpush1.msra.mxu0 %v156
    %191 = vmatprep.subr.mxu0 0.0
    %192 = vmatpush1.msra.mxu0 %v157
    %193 = vmatprep.subr.mxu0 0.0
    %194 = vmatpush1.msra.mxu0 %v158
    %195 = vmatprep.subr.mxu0 0.0
    %196 = vmatpush1.msra.mxu0 %v159
    %197 = vmatprep.subr.mxu0 0.0
    %198 = vmatpush1.msra.mxu0 %v160
    %199 = vmatprep.subr.mxu0 0.0
    %200 = vmatpush1.msra.mxu0 %v161
    %201 = vmatprep.subr.mxu0 0.0
    %202 = vmatpush1.msra.mxu0 0.0
    %203 = vmatprep.subr.mxu0 0.0
    %204 = vmatpush1.msra.mxu0 0.0
    %205 = vmatprep.subr.mxu0 0.0
    %206 = vmatpush1.msra.mxu0 0.0
    %207 = vmatprep.subr.mxu0 0.0
    %208 = vmatpush1.msra.mxu0 0.0
    %209 = vmatprep.subr.mxu0 0.0
    %210 = vmatpush1.msra.mxu0 0.0
    %211 = vmatprep.subr.mxu0 0.0
    %212 = vmatpush1.msra.mxu0 0.0
    %213 = vmatprep.subr.mxu0 0.0
    %214 = vmatpush1.msra.mxu0 0.0
    %215 = vmatprep.subr.mxu0 0.0
    %216 = vmatpush1.msra.mxu0 0.0
    %217 = vmatprep.subr.mxu0 0.0
    %218 = vmatpush1.msra.mxu0 0.0
    %219 = vmatprep.subr.mxu0 0.0
    %220 = vmatpush1.msra.mxu0 0.0
    %221 = vmatprep.subr.mxu0 0.0
    %222 = vmatpush1.msra.mxu0 0.0
    %223 = vmatprep.subr.mxu0 0.0
    %224 = vmatpush1.msra.mxu0 0.0
    %225 = vmatprep.subr.mxu0 0.0
    %226 = vmatpush1.msra.mxu0 0.0
    %227 = vmatprep.subr.mxu0 0.0
    %228 = vmatpush1.msra.mxu0 0.0
    %229 = vmatprep.subr.mxu0 0.0
    %230 = vmatpush1.msra.mxu0 0.0
    %231 = vmatprep.subr.mxu0 0.0
    %232 = vmatpush1.msra.mxu0 0.0
    %233 = vmatprep.mubr.f32.mxu0 0.0
    %234 = vmatmul.mubr.f32.gmra.mrb[0].mxu0 %v145
    %v235 = vpop.f32.mrb[0].mxu0
    %v236 = vadd.f32 %v167, %v235
    %v237 = vpop.f32.mrb[0].mxu0
    %238 = vdwg.mxu0
    %239 = vst [vmem:[#allocation8] sm:$0x3] %v236
    // Predicated region
    $region34: #{tpu_custom_call.1} parent=1 // pred_check
      _
    $region35: #{tpu_custom_call.1} parent=1 // pred_check_branch
      %241 = sbr.rel (0) target = $region37
    $region36: #{tpu_custom_call.1} parent=1 // pred_region
      %s243 = ssub.s32 32, 32
      %244 = vsyncadd [#allocation4], %s243
      %s246 = sshll.u32 [#allocation8], 4
      %s247 = int_to_ptr.vmem [resolvable:$true] %s246
      %249 = dma.vmem_to_hbm [thread:$0]  %s247, 32, %s5, [#allocation4]
    $region37: #{tpu_custom_call.1} parent=1 // pred_fallthru
      _
    // Predicated region
    $region38: #{tpu_custom_call.1} parent=1 // pred_check
      _
    $region39: #{tpu_custom_call.1} parent=1 // pred_check_branch
      %251 = sbr.rel (0) target = $region41
    $region40: #{tpu_custom_call.1} parent=1 // pred_region
      %252 = dma.done [#allocation4], 32
    $region41: #{tpu_custom_call.1} parent=1 // pred_fallthru
      _
    %253 = vsyncpa [#allocation3], 1
    %254 = vsyncpa [#allocation6], 1
    %255 = vsyncpa [#allocation4], 1

</llo_original>
